<compile_context>
chip_gen: v7x
topology: tpu7x:2x2x1
jax: 0.10.0
libtpu: 0.0.40
codegen_flags: <defaults>
</compile_context>

<pallas_src>
import jax
import jax.numpy as jnp
from jax import lax
from jax.experimental import pallas as pl
from jax.experimental.pallas import tpu as pltpu


def _round_up(n, m):
    return ((n + m - 1) // m) * m


def mlp_kernel(x_ref, w1t_ref, b1_ref, w2t_ref, b2_ref, w3_ref, b3_ref, o_ref):
    # fc1 ("NT" matmul): (h1, in) x (tb, in) contracted on the last dims
    # -> (h1, tb).  Batch lands on the lane axis; f32 accumulation on MXU.
    h1 = lax.dot_general(
        w1t_ref[...], x_ref[...],
        dimension_numbers=(((1,), (1,)), ((), ())),
        preferred_element_type=jnp.float32,
    )
    h1 = jnp.maximum(h1 + b1_ref[...], 0.0)          # b1: (h1,1) broadcasts over lanes
    # fc2: (h2, h1) @ (h1, tb) -> (h2, tb).  Cast activations to the weight
    # dtype so the bf16 path feeds bf16 MXU operands (no-op for f32).
    h2 = jnp.dot(w2t_ref[...], h1.astype(w2t_ref.dtype),
                 preferred_element_type=jnp.float32)
    h2 = jnp.maximum(h2 + b2_ref[...], 0.0)
    # fc3: (1, h2) @ (h2, tb) -> (1, tb).  MXU does the reduction; result is
    # lane-dense so the writeback is an unmasked dense store.
    y = jnp.dot(w3_ref[...], h2, preferred_element_type=jnp.float32) + b3_ref[0, 0]
    o_ref[...] = y.astype(o_ref.dtype)


def neural_network_forward(x, params, *, block_batch=8192, use_bf16=True):
    """x: (batch, input_dim). params: w{1,2,3} as (in,out), b{1,2,3} as (1,out)."""
    batch, input_dim = x.shape
    w1, b1 = params["w1"], params["b1"]
    w2, b2 = params["w2"], params["b2"]
    w3, b3 = params["w3"], params["b3"]
    hidden1 = w1.shape[1]            # 128
    hidden2 = w2.shape[1]            # 64

    # One-time (tiny) weight re-layout for the transposed pipeline.
    w1t = w1.T                        # (hidden1, input_dim)
    w2t = w2.T                        # (hidden2, hidden1)
    w3r = w3.reshape(1, hidden2)      # (1, hidden2) row
    b1c = b1.reshape(hidden1, 1)      # (hidden1, 1) column
    b2c = b2.reshape(hidden2, 1)      # (hidden2, 1) column
    b3s = b3.reshape(1, 1)            # scalar -> SMEM

    if use_bf16:
        # bf16-native MXU on v5e/v6e/v7x; halves x HBM traffic.  Accumulation
        # stays f32 inside the kernel via preferred_element_type.
        x = x.astype(jnp.bfloat16)
        w1t = w1t.astype(jnp.bfloat16)
        w2t = w2t.astype(jnp.bfloat16)

    # Batch tile: large (amortizes ~0.35us/step overhead), multiple of 128
    # (lane-aligned output, bf16 sublane packing), capped at ~ceil(batch/2)
    # so the parallel axis has >= 2 steps for v7x's two TensorCores, and small
    # enough (~10 MiB at tb=8192) to double-buffer within scoped VMEM.
    if batch <= 256:
        tb = batch                                   # single exact-shape block
    else:
        cap = max(128, (block_batch // 128) * 128)
        tb = min(cap, _round_up(pl.cdiv(batch, 2), 128))
    grid = (pl.cdiv(batch, tb),)

    flops = 2 * batch * (input_dim * hidden1 + hidden1 * hidden2 + hidden2)
    bytes_accessed = (
        batch * input_dim * jnp.dtype(x.dtype).itemsize      # x read (single pass, no pad copy)
        + batch * 4                                           # output write
        + w1t.size * jnp.dtype(w1t.dtype).itemsize
        + w2t.size * jnp.dtype(w2t.dtype).itemsize
        + (w3r.size + b1c.size + b2c.size + 1) * 4
    )
    cost = pl.CostEstimate(flops=flops, transcendentals=0,
                           bytes_accessed=bytes_accessed)

    def resident(shape):
        # Constant index_map: block stays VMEM-resident across grid steps.
        return pl.BlockSpec(shape, lambda i: (0, 0))

    out = pl.pallas_call(
        mlp_kernel,
        out_shape=jax.ShapeDtypeStruct((1, batch), jnp.float32),
        grid=grid,
        in_specs=[
            pl.BlockSpec((tb, input_dim), lambda i: (i, 0)),      # x: batch-tiled
            resident((hidden1, input_dim)),                       # W1^T
            resident((hidden1, 1)),                               # b1 column
            resident((hidden2, hidden1)),                         # W2^T
            resident((hidden2, 1)),                               # b2 column
            resident((1, hidden2)),                               # w3 row
            pl.BlockSpec(memory_space=pltpu.MemorySpace.SMEM),    # b3 scalar
        ],
        out_specs=pl.BlockSpec((1, tb), lambda i: (0, i)),        # lane-dense output
        compiler_params=pltpu.CompilerParams(
            dimension_semantics=("parallel",),
            vmem_limit_bytes=32 * 1024 * 1024,
        ),
        cost_estimate=cost,
    )(x, w1t, b1c, w2t, b2c, w3r, b3s)
    # (1, batch) -> (batch, 1): contiguous reshape, no transpose / extra HBM pass.
    return out.reshape(batch, 1)


def init_params(key, input_dim):
    """Deterministic init mirroring PyTorch nn.Linear: U(-1/sqrt(fan_in), +1/sqrt(fan_in))."""
    dims = [(input_dim, 128), (128, 64), (64, 1)]
    params = {}
    for idx, (fan_in, fan_out) in enumerate(dims, start=1):
        key, kw, kb = jax.random.split(key, 3)
        bound = 1.0 / jnp.sqrt(fan_in)
        params[f"w{idx}"] = jax.random.uniform(
            kw, (fan_in, fan_out), jnp.float32, minval=-bound, maxval=bound)
        params[f"b{idx}"] = jax.random.uniform(
            kb, (1, fan_out), jnp.float32, minval=-bound, maxval=bound)
    return params


def reference_forward(x, params):
    h1 = jnp.maximum(x @ params["w1"] + params["b1"], 0.0)
    h2 = jnp.maximum(h1 @ params["w2"] + params["b2"], 0.0)
    return h2 @ params["w3"] + params["b3"]


if __name__ == "__main__":
    key = jax.random.PRNGKey(0)
    key, kx, kx2 = jax.random.split(key, 3)

    batch, input_dim = 8, 32
    x = jax.random.normal(kx, (batch, input_dim), jnp.float32)
    params = init_params(key, input_dim)

    # Small f32 check (single exact-shape grid step).
    out = jax.block_until_ready(neural_network_forward(x, params, use_bf16=False))
    ref = reference_forward(x, params)
    assert out.shape == (batch, 1), out.shape
    assert jnp.allclose(out, ref, atol=1e-4, rtol=1e-4), "mismatch vs reference (small f32)"

    # Multi-step grid + ragged final block (no wrapper pad), f32 path.
    big_batch = 1000
    x_big = jax.random.normal(kx2, (big_batch, input_dim), jnp.float32)
    out_big = jax.block_until_ready(
        neural_network_forward(x_big, params, block_batch=256, use_bf16=False))
    ref_big = reference_forward(x_big, params)
    assert out_big.shape == (big_batch, 1), out_big.shape
    assert jnp.allclose(out_big, ref_big, atol=1e-4, rtol=1e-4), "mismatch vs reference (big f32)"

    # Default bf16-operand path (f32 accumulation): loose tolerance sanity check.
    out_bf16 = jax.block_until_ready(neural_network_forward(x_big, params))
    assert out_bf16.shape == (big_batch, 1), out_bf16.shape
    assert float(jnp.max(jnp.abs(out_bf16 - ref_big))) < 0.1, "bf16 path diverged"

    print("KERNEL_OK")
</pallas_src>

<mosaic_0001>
module attributes {stable_mosaic.version = 11 : i64} {
  func.func @mlp_kernel(%arg0: i32, %arg1: memref<8x32xf32, #tpu.memory_space<vmem>>, %arg2: memref<128x32xf32, #tpu.memory_space<vmem>>, %arg3: memref<128x1xf32, #tpu.memory_space<vmem>>, %arg4: memref<64x128xf32, #tpu.memory_space<vmem>>, %arg5: memref<64x1xf32, #tpu.memory_space<vmem>>, %arg6: memref<1x64xf32, #tpu.memory_space<vmem>>, %arg7: memref<1x1xf32, #tpu.memory_space<smem>>, %arg8: memref<1x8xf32, #tpu.memory_space<vmem>>) attributes {dimension_semantics = [#tpu.dimension_semantics<parallel>], iteration_bounds = array<i64: 1>, scalar_prefetch = 0 : i64, scratch_operands = 0 : i64, tpu.core_type = #tpu.core_type<tc>, window_params = [{transform_indices = @transform_0, window_bounds = array<i64: 8, 32>}, {pipeline_mode = #tpu.pipeline_mode<synchronous>, transform_indices = @transform_1, window_bounds = array<i64: 128, 32>}, {pipeline_mode = #tpu.pipeline_mode<synchronous>, transform_indices = @transform_2, window_bounds = array<i64: 128, 1>}, {pipeline_mode = #tpu.pipeline_mode<synchronous>, transform_indices = @transform_3, window_bounds = array<i64: 64, 128>}, {pipeline_mode = #tpu.pipeline_mode<synchronous>, transform_indices = @transform_4, window_bounds = array<i64: 64, 1>}, {pipeline_mode = #tpu.pipeline_mode<synchronous>, transform_indices = @transform_5, window_bounds = array<i64: 1, 64>}, {transform_indices = @transform_6, window_bounds = array<i64: 1, 1>}, {transform_indices = @transform_7, window_bounds = array<i64: 1, 8>}]} {
    %c0 = arith.constant 0 : index
    %c0_0 = arith.constant 0 : index
    %0 = vector.load %arg2[%c0, %c0_0] : memref<128x32xf32, #tpu.memory_space<vmem>>, vector<128x32xf32>
    %c0_1 = arith.constant 0 : index
    %c0_2 = arith.constant 0 : index
    %1 = vector.load %arg1[%c0_1, %c0_2] : memref<8x32xf32, #tpu.memory_space<vmem>>, vector<8x32xf32>
    %cst = arith.constant dense<0.000000e+00> : vector<128x8xf32>
    %2 = tpu.matmul %0, %1, %cst {dimension_numbers = #tpu.dot_dimension_numbers<[1], [1], [0], [0], [0, 0, 1, 0], [], []>} : vector<128x32xf32>, vector<8x32xf32>, vector<128x8xf32> -> vector<128x8xf32>
    %c0_3 = arith.constant 0 : index
    %c0_4 = arith.constant 0 : index
    %3 = vector.load %arg3[%c0_3, %c0_4] : memref<128x1xf32, #tpu.memory_space<vmem>>, vector<128x1xf32>
    %4 = vector.broadcast %3 : vector<128x1xf32> to vector<128x8xf32>
    %5 = arith.addf %2, %4 : vector<128x8xf32>
    %cst_5 = arith.constant 0.000000e+00 : f32
    %6 = vector.broadcast %cst_5 : f32 to vector<128x8xf32>
    %7 = arith.maximumf %5, %6 : vector<128x8xf32>
    %c0_6 = arith.constant 0 : index
    %c0_7 = arith.constant 0 : index
    %8 = vector.load %arg4[%c0_6, %c0_7] : memref<64x128xf32, #tpu.memory_space<vmem>>, vector<64x128xf32>
    %cst_8 = arith.constant dense<0.000000e+00> : vector<64x8xf32>
    %9 = tpu.matmul %8, %7, %cst_8 {dimension_numbers = #tpu.dot_dimension_numbers<[1], [0], [0], [1], [0, 0, 1, 1], [], []>} : vector<64x128xf32>, vector<128x8xf32>, vector<64x8xf32> -> vector<64x8xf32>
    %c0_9 = arith.constant 0 : index
    %c0_10 = arith.constant 0 : index
    %10 = vector.load %arg5[%c0_9, %c0_10] : memref<64x1xf32, #tpu.memory_space<vmem>>, vector<64x1xf32>
    %11 = vector.broadcast %10 : vector<64x1xf32> to vector<64x8xf32>
    %12 = arith.addf %9, %11 : vector<64x8xf32>
    %cst_11 = arith.constant 0.000000e+00 : f32
    %13 = vector.broadcast %cst_11 : f32 to vector<64x8xf32>
    %14 = arith.maximumf %12, %13 : vector<64x8xf32>
    %c0_12 = arith.constant 0 : index
    %c0_13 = arith.constant 0 : index
    %15 = vector.load %arg6[%c0_12, %c0_13] : memref<1x64xf32, #tpu.memory_space<vmem>>, vector<1x64xf32>
    %cst_14 = arith.constant dense<0.000000e+00> : vector<1x8xf32>
    %16 = tpu.matmul %15, %14, %cst_14 {dimension_numbers = #tpu.dot_dimension_numbers<[1], [0], [0], [1], [0, 0, 1, 1], [], []>} : vector<1x64xf32>, vector<64x8xf32>, vector<1x8xf32> -> vector<1x8xf32>
    %c0_15 = arith.constant 0 : index
    %c0_16 = arith.constant 0 : index
    %17 = memref.load %arg7[%c0_15, %c0_16] : memref<1x1xf32, #tpu.memory_space<smem>>
    %18 = vector.broadcast %17 : f32 to vector<1x8xf32>
    %19 = arith.addf %16, %18 : vector<1x8xf32>
    %c0_17 = arith.constant 0 : index
    %c0_18 = arith.constant 0 : index
    %20 = vector.load %arg8[%c0_17, %c0_18] : memref<1x8xf32, #tpu.memory_space<vmem>>, vector<1x8xf32>
    tpu.vector_store %arg8[%c0_17, %c0_18], %19 {strides = array<i32>} : memref<1x8xf32, #tpu.memory_space<vmem>>, vector<1x8xf32>,
    return
  }
  func.func @transform_0(%arg0: i32) -> (i32, i32) {
    %c0_i32 = arith.constant 0 : i32
    %c0_i32_0 = arith.constant 0 : i32
    return %arg0, %c0_i32 : i32, i32
  }
  func.func @transform_1(%arg0: i32) -> (i32, i32) {
    %c0_i32 = arith.constant 0 : i32
    %c0_i32_0 = arith.constant 0 : i32
    %c0_i32_1 = arith.constant 0 : i32
    return %c0_i32, %c0_i32_0 : i32, i32
  }
  func.func @transform_2(%arg0: i32) -> (i32, i32) {
    %c0_i32 = arith.constant 0 : i32
    %c0_i32_0 = arith.constant 0 : i32
    %c0_i32_1 = arith.constant 0 : i32
    return %c0_i32, %c0_i32_0 : i32, i32
  }
  func.func @transform_3(%arg0: i32) -> (i32, i32) {
    %c0_i32 = arith.constant 0 : i32
    %c0_i32_0 = arith.constant 0 : i32
    %c0_i32_1 = arith.constant 0 : i32
    return %c0_i32, %c0_i32_0 : i32, i32
  }
  func.func @transform_4(%arg0: i32) -> (i32, i32) {
    %c0_i32 = arith.constant 0 : i32
    %c0_i32_0 = arith.constant 0 : i32
    %c0_i32_1 = arith.constant 0 : i32
    return %c0_i32, %c0_i32_0 : i32, i32
  }
  func.func @transform_5(%arg0: i32) -> (i32, i32) {
    %c0_i32 = arith.constant 0 : i32
    %c0_i32_0 = arith.constant 0 : i32
    %c0_i32_1 = arith.constant 0 : i32
    return %c0_i32, %c0_i32_0 : i32, i32
  }
  func.func @transform_6(%arg0: i32) -> (i32, i32) {
    %c0_i32 = arith.constant 0 : i32
    %c0_i32_0 = arith.constant 0 : i32
    %c0_i32_1 = arith.constant 0 : i32
    return %c0_i32, %c0_i32_0 : i32, i32
  }
  func.func @transform_7(%arg0: i32) -> (i32, i32) {
    %c0_i32 = arith.constant 0 : i32
    %c0_i32_0 = arith.constant 0 : i32
    return %c0_i32, %arg0 : i32, i32
  }
}

</mosaic_0001>

<llo_original>
// kernel: tpu_custom_call.1
$region0: #{tpu_custom_call.1}
  #allocation0 [shape = 'u32[]', space=smem, size = 0x4, offset = 0x4, fixed_abs, tag = 'smem constant byte address 0x4 - core index']
  #allocation1 [shape = 'u32[144,128]{1,0:T(1,128)}', space=vmem, size = 0x12000, scoped, tag = 'internal scratch']
  #allocation2 [shape = 'f32[1,1]{1,0:T(1,128)S(6)}', space=smem, size = 0x200, scoped, tag = 'scoped memory for tpu_custom_call.1']
  %s0 = inlined_call_operand.vmem [shape: f32[8,32], index: 0, kind: input, shape index: {}]
  %s1 = inlined_call_operand.vmem [shape: f32[128,32], index: 1, kind: input, shape index: {}]
  %s2 = inlined_call_operand.vmem [shape: f32[128,1], index: 2, kind: input, shape index: {}]
  %s3 = inlined_call_operand.vmem [shape: f32[64,128], index: 3, kind: input, shape index: {}]
  %s4 = inlined_call_operand.vmem [shape: f32[64,1], index: 4, kind: input, shape index: {}]
  %s5 = inlined_call_operand.vmem [shape: f32[1,64], index: 5, kind: input, shape index: {}]
  %s6 = inlined_call_operand.<no memory space> [shape: f32[1,1], index: 6, kind: input, shape index: {}]
  %s7 = inlined_call_operand.hbm [shape: f32[1,8], index: 7, kind: output, shape index: {}]
  %s8 = sld [smem:[#allocation0]]
  $region38: #{tpu_custom_call.1} parent=0
    _
  %s10 = ssub.s32 1, %s8
  %s11 = scalar_select 0, %s10, %s8
  %12 = sst [smem:[#allocation2]] %s6
  $region1: #{tpu_custom_call.1} parent=0
    #allocation3 [shape = 'u8[512]{0}', space=vmem, size = 0x400, scoped, tag = 'output window, operand 0, single buffered']
    #allocation4 [shape = 's32[1]{0}', space=sflag, size = 0x4, scoped, tag = 'scoped memory for tpu_custom_call.1']
    %13 = vsyncpa [#allocation4], 0
    // Predicated region
    $region2: #{tpu_custom_call.1} parent=1 // pred_check
      _
    $region3: #{tpu_custom_call.1} parent=1 // pred_check_branch
      %15 = sbr.rel (0) target = $region5
    $region4: #{tpu_custom_call.1} parent=1 // pred_region
      _
    $region5: #{tpu_custom_call.1} parent=1 // pred_fallthru
      _
    // Predicated region
    $region6: #{tpu_custom_call.1} parent=1 // pred_check
      _
    $region7: #{tpu_custom_call.1} parent=1 // pred_check_branch
      %17 = sbr.rel (0) target = $region9
    $region8: #{tpu_custom_call.1} parent=1 // pred_region
      _
    $region9: #{tpu_custom_call.1} parent=1 // pred_fallthru
      _
    // Predicated region
    $region10: #{tpu_custom_call.1} parent=1 // pred_check
      _
    $region11: #{tpu_custom_call.1} parent=1 // pred_check_branch
      %19 = sbr.rel (0) target = $region13
    $region12: #{tpu_custom_call.1} parent=1 // pred_region
      _
    $region13: #{tpu_custom_call.1} parent=1 // pred_fallthru
      _
    // Predicated region
    $region14: #{tpu_custom_call.1} parent=1 // pred_check
      _
    $region15: #{tpu_custom_call.1} parent=1 // pred_check_branch
      %21 = sbr.rel (0) target = $region17
    $region16: #{tpu_custom_call.1} parent=1 // pred_region
      _
    $region17: #{tpu_custom_call.1} parent=1 // pred_fallthru
      _
    // Predicated region
    $region18: #{tpu_custom_call.1} parent=1 // pred_check
      _
    $region19: #{tpu_custom_call.1} parent=1 // pred_check_branch
      %23 = sbr.rel (0) target = $region21
    $region20: #{tpu_custom_call.1} parent=1 // pred_region
      _
    $region21: #{tpu_custom_call.1} parent=1 // pred_fallthru
      _
    // Predicated region
    $region22: #{tpu_custom_call.1} parent=1 // pred_check
      _
    $region23: #{tpu_custom_call.1} parent=1 // pred_check_branch
      %25 = sbr.rel (0) target = $region25
    $region24: #{tpu_custom_call.1} parent=1 // pred_region
      _
    $region25: #{tpu_custom_call.1} parent=1 // pred_fallthru
      _
    // Predicated region
    $region26: #{tpu_custom_call.1} parent=1 // pred_check
      _
    $region27: #{tpu_custom_call.1} parent=1 // pred_check_branch
      %27 = sbr.rel (0) target = $region29
    $region28: #{tpu_custom_call.1} parent=1 // pred_region
      _
    $region29: #{tpu_custom_call.1} parent=1 // pred_fallthru
      _
    %v28 = vld [vmem:[%s1] sm:$0xff]
    %v29 = vld [vmem:[%s1 + $0x8] sm:$0xff]
    %v30 = vld [vmem:[%s1 + $0x10] sm:$0xff]
    %v31 = vld [vmem:[%s1 + $0x18] sm:$0xff]
    %v32 = vld [vmem:[%s1 + $0x20] sm:$0xff]
    %v33 = vld [vmem:[%s1 + $0x28] sm:$0xff]
    %v34 = vld [vmem:[%s1 + $0x30] sm:$0xff]
    %v35 = vld [vmem:[%s1 + $0x38] sm:$0xff]
    %v36 = vld [vmem:[%s1 + $0x40] sm:$0xff]
    %v37 = vld [vmem:[%s1 + $0x48] sm:$0xff]
    %v38 = vld [vmem:[%s1 + $0x50] sm:$0xff]
    %v39 = vld [vmem:[%s1 + $0x58] sm:$0xff]
    %v40 = vld [vmem:[%s1 + $0x60] sm:$0xff]
    %v41 = vld [vmem:[%s1 + $0x68] sm:$0xff]
    %v42 = vld [vmem:[%s1 + $0x70] sm:$0xff]
    %v43 = vld [vmem:[%s1 + $0x78] sm:$0xff]
    %v44 = vld [vmem:[%s0] sm:$0xff]
    %v45 = vld [vmem:[%s2] sm:$0xff]
    %v46 = vld [vmem:[%s2 + $0x8] sm:$0xff]
    %v47 = vld [vmem:[%s2 + $0x10] sm:$0xff]
    %v48 = vld [vmem:[%s2 + $0x18] sm:$0xff]
    %v49 = vld [vmem:[%s2 + $0x20] sm:$0xff]
    %v50 = vld [vmem:[%s2 + $0x28] sm:$0xff]
    %v51 = vld [vmem:[%s2 + $0x30] sm:$0xff]
    %v52 = vld [vmem:[%s2 + $0x38] sm:$0xff]
    %v53 = vld [vmem:[%s2 + $0x40] sm:$0xff]
    %v54 = vld [vmem:[%s2 + $0x48] sm:$0xff]
    %v55 = vld [vmem:[%s2 + $0x50] sm:$0xff]
    %v56 = vld [vmem:[%s2 + $0x58] sm:$0xff]
    %v57 = vld [vmem:[%s2 + $0x60] sm:$0xff]
    %v58 = vld [vmem:[%s2 + $0x68] sm:$0xff]
    %v59 = vld [vmem:[%s2 + $0x70] sm:$0xff]
    %v60 = vld [vmem:[%s2 + $0x78] sm:$0xff]
    %62 = vset.pattern.permute.xlu0 0
    %63 = vperm.xlu0 %62, %v45
    %v64 = vpop.permute.xlu0 %63
    %67 = vset.pattern.permute.xlu0 0
    %68 = vperm.xlu0 %67, %v46
    %v69 = vpop.permute.xlu0 %68
    %72 = vset.pattern.permute.xlu0 0
    %73 = vperm.xlu0 %72, %v47
    %v74 = vpop.permute.xlu0 %73
    %77 = vset.pattern.permute.xlu0 0
    %78 = vperm.xlu0 %77, %v48
    %v79 = vpop.permute.xlu0 %78
    %82 = vset.pattern.permute.xlu0 0
    %83 = vperm.xlu0 %82, %v49
    %v84 = vpop.permute.xlu0 %83
    %87 = vset.pattern.permute.xlu0 0
    %88 = vperm.xlu0 %87, %v50
    %v89 = vpop.permute.xlu0 %88
    %92 = vset.pattern.permute.xlu0 0
    %93 = vperm.xlu0 %92, %v51
    %v94 = vpop.permute.xlu0 %93
    %97 = vset.pattern.permute.xlu0 0
    %98 = vperm.xlu0 %97, %v52
    %v99 = vpop.permute.xlu0 %98
    %102 = vset.pattern.permute.xlu0 0
    %103 = vperm.xlu0 %102, %v53
    %v104 = vpop.permute.xlu0 %103
    %107 = vset.pattern.permute.xlu0 0
    %108 = vperm.xlu0 %107, %v54
    %v109 = vpop.permute.xlu0 %108
    %112 = vset.pattern.permute.xlu0 0
    %113 = vperm.xlu0 %112, %v55
    %v114 = vpop.permute.xlu0 %113
    %117 = vset.pattern.permute.xlu0 0
    %118 = vperm.xlu0 %117, %v56
    %v119 = vpop.permute.xlu0 %118
    %122 = vset.pattern.permute.xlu0 0
    %123 = vperm.xlu0 %122, %v57
    %v124 = vpop.permute.xlu0 %123
    %127 = vset.pattern.permute.xlu0 0
    %128 = vperm.xlu0 %127, %v58
    %v129 = vpop.permute.xlu0 %128
    %132 = vset.pattern.permute.xlu0 0
    %133 = vperm.xlu0 %132, %v59
    %v134 = vpop.permute.xlu0 %133
    %137 = vset.pattern.permute.xlu0 0
    %138 = vperm.xlu0 %137, %v60
    %v139 = vpop.permute.xlu0 %138
    %vm141 = vcmask 261120
    %v143 = vsel %vm141, %v28, 0
    %v146 = vsel %vm141, %v29, 0
    %v149 = vsel %vm141, %v30, 0
    %v152 = vsel %vm141, %v31, 0
    %v155 = vsel %vm141, %v32, 0
    %v158 = vsel %vm141, %v33, 0
    %v161 = vsel %vm141, %v34, 0
    %v164 = vsel %vm141, %v35, 0
    %v167 = vsel %vm141, %v36, 0
    %v170 = vsel %vm141, %v37, 0
    %v173 = vsel %vm141, %v38, 0
    %v176 = vsel %vm141, %v39, 0
    %v179 = vsel %vm141, %v40, 0
    %v182 = vsel %vm141, %v41, 0
    %v185 = vsel %vm141, %v42, 0
    %v188 = vsel %vm141, %v43, 0
    %v191 = vsel %vm141, %v44, 0
    %193 = vmatprep.subr.mxu0 0.0
    %194 = vmatpush1.xpose.msra.mxu0 %v191
    %195 = vmatprep.subr.mxu0 0.0
    %196 = vmatpush1.xpose.msra.mxu0 0.0
    %197 = vmatprep.subr.mxu0 0.0
    %198 = vmatpush1.xpose.msra.mxu0 0.0
    %199 = vmatprep.subr.mxu0 0.0
    %200 = vmatpush1.xpose.msra.mxu0 0.0
    %201 = vmatprep.subr.mxu0 0.0
    %202 = vmatpush1.xpose.msra.mxu0 0.0
    %203 = vmatprep.subr.mxu0 0.0
    %204 = vmatpush1.xpose.msra.mxu0 0.0
    %205 = vmatprep.subr.mxu0 0.0
    %206 = vmatpush1.xpose.msra.mxu0 0.0
    %207 = vmatprep.subr.mxu0 0.0
    %208 = vmatpush1.xpose.msra.mxu0 0.0
    %209 = vmatprep.subr.mxu0 0.0
    %210 = vmatpush1.xpose.msra.mxu0 0.0
    %211 = vmatprep.subr.mxu0 0.0
    %212 = vmatpush1.xpose.msra.mxu0 0.0
    %213 = vmatprep.subr.mxu0 0.0
    %214 = vmatpush1.xpose.msra.mxu0 0.0
    %215 = vmatprep.subr.mxu0 0.0
    %216 = vmatpush1.xpose.msra.mxu0 0.0
    %217 = vmatprep.subr.mxu0 0.0
    %218 = vmatpush1.xpose.msra.mxu0 0.0
    %219 = vmatprep.subr.mxu0 0.0
    %220 = vmatpush1.xpose.msra.mxu0 0.0
    %221 = vmatprep.subr.mxu0 0.0
    %222 = vmatpush1.xpose.msra.mxu0 0.0
    %223 = vmatprep.subr.mxu0 0.0
    %224 = vmatpush1.xpose.msra.mxu0 0.0
    %225 = vmatprep.subr.mxu0 0.0
    %226 = vmatpush1.xpose.msra.mxu0 0.0
    %227 = vmatprep.subr.mxu0 0.0
    %228 = vmatpush1.xpose.msra.mxu0 0.0
    %229 = vmatprep.subr.mxu0 0.0
    %230 = vmatpush1.xpose.msra.mxu0 0.0
    %231 = vmatprep.subr.mxu0 0.0
    %232 = vmatpush1.xpose.msra.mxu0 0.0
    %233 = vmatprep.subr.mxu0 0.0
    %234 = vmatpush1.xpose.msra.mxu0 0.0
    %235 = vmatprep.subr.mxu0 0.0
    %236 = vmatpush1.xpose.msra.mxu0 0.0
    %237 = vmatprep.subr.mxu0 0.0
    %238 = vmatpush1.xpose.msra.mxu0 0.0
    %239 = vmatprep.subr.mxu0 0.0
    %240 = vmatpush1.xpose.msra.mxu0 0.0
    %241 = vmatprep.subr.mxu0 0.0
    %242 = vmatpush1.xpose.msra.mxu0 0.0
    %243 = vmatprep.subr.mxu0 0.0
    %244 = vmatpush1.xpose.msra.mxu0 0.0
    %245 = vmatprep.subr.mxu0 0.0
    %246 = vmatpush1.xpose.msra.mxu0 0.0
    %247 = vmatprep.subr.mxu0 0.0
    %248 = vmatpush1.xpose.msra.mxu0 0.0
    %249 = vmatprep.subr.mxu0 0.0
    %250 = vmatpush1.xpose.msra.mxu0 0.0
    %251 = vmatprep.subr.mxu0 0.0
    %252 = vmatpush1.xpose.msra.mxu0 0.0
    %253 = vmatprep.subr.mxu0 0.0
    %254 = vmatpush1.xpose.msra.mxu0 0.0
    %255 = vmatprep.subr.mxu0 0.0
    %256 = vmatpush1.xpose.msra.mxu0 0.0
    %257 = vmatprep.mubr.f32.mxu0 0.0
    %258 = vmatmul.mubr.f32.gmra.mrb[0].mxu0 %v143
    %v259 = vpop.f32.mrb[0].mxu0
    %v260 = vadd.f32 %v64, %v259
    %v261 = vpop.f32.mrb[0].mxu0
    %262 = vmatprep.mubr.f32.mxu0 0.0
    %263 = vmatmul.mubr.f32.gmra.mrb[0].mxu0 %v146
    %v264 = vpop.f32.mrb[0].mxu0
    %v265 = vadd.f32 %v69, %v264
    %v266 = vpop.f32.mrb[0].mxu0
    %267 = vmatprep.mubr.f32.mxu0 0.0
    %268 = vmatmul.mubr.f32.gmra.mrb[0].mxu0 %v149
    %v269 = vpop.f32.mrb[0].mxu0
    %v270 = vadd.f32 %v74, %v269
    %v271 = vpop.f32.mrb[0].mxu0
    %272 = vmatprep.mubr.f32.mxu0 0.0
    %273 = vmatmul.mubr.f32.gmra.mrb[0].mxu0 %v152
    %v274 = vpop.f32.mrb[0].mxu0
    %v275 = vadd.f32 %v79, %v274
    %v276 = vpop.f32.mrb[0].mxu0
    %277 = vmatprep.mubr.f32.mxu0 0.0
    %278 = vmatmul.mubr.f32.gmra.mrb[0].mxu0 %v155
    %v279 = vpop.f32.mrb[0].mxu0
    %v280 = vadd.f32 %v84, %v279
    %v281 = vpop.f32.mrb[0].mxu0
    %282 = vmatprep.mubr.f32.mxu0 0.0
    %283 = vmatmul.mubr.f32.gmra.mrb[0].mxu0 %v158
    %v284 = vpop.f32.mrb[0].mxu0
    %v285 = vadd.f32 %v89, %v284
    %v286 = vpop.f32.mrb[0].mxu0
    %287 = vmatprep.mubr.f32.mxu0 0.0
    %288 = vmatmul.mubr.f32.gmra.mrb[0].mxu0 %v161
    %v289 = vpop.f32.mrb[0].mxu0
    %v290 = vadd.f32 %v94, %v289
    %v291 = vpop.f32.mrb[0].mxu0
    %292 = vmatprep.mubr.f32.mxu0 0.0
    %293 = vmatmul.mubr.f32.gmra.mrb[0].mxu0 %v164
    %v294 = vpop.f32.mrb[0].mxu0
    %v295 = vadd.f32 %v99, %v294
    %v296 = vpop.f32.mrb[0].mxu0
    %297 = vmatprep.mubr.f32.mxu0 0.0
    %298 = vmatmul.mubr.f32.gmra.mrb[0].mxu0 %v167
    %v299 = vpop.f32.mrb[0].mxu0
    %v300 = vadd.f32 %v104, %v299
    %v301 = vpop.f32.mrb[0].mxu0
    %302 = vmatprep.mubr.f32.mxu0 0.0
    %303 = vmatmul.mubr.f32.gmra.mrb[0].mxu0 %v170
    %v304 = vpop.f32.mrb[0].mxu0
    %v305 = vadd.f32 %v109, %v304
    %v306 = vpop.f32.mrb[0].mxu0
    %307 = vmatprep.mubr.f32.mxu0 0.0
    %308 = vmatmul.mubr.f32.gmra.mrb[0].mxu0 %v173
    %v309 = vpop.f32.mrb[0].mxu0
    %v310 = vadd.f32 %v114, %v309
    %v311 = vpop.f32.mrb[0].mxu0
    %312 = vmatprep.mubr.f32.mxu0 0.0
    %313 = vmatmul.mubr.f32.gmra.mrb[0].mxu0 %v176
    %v314 = vpop.f32.mrb[0].mxu0
    %v315 = vadd.f32 %v119, %v314
    %v316 = vpop.f32.mrb[0].mxu0
    %317 = vmatprep.mubr.f32.mxu0 0.0
    %318 = vmatmul.mubr.f32.gmra.mrb[0].mxu0 %v179
    %v319 = vpop.f32.mrb[0].mxu0
    %v320 = vadd.f32 %v124, %v319
    %v321 = vpop.f32.mrb[0].mxu0
    %322 = vmatprep.mubr.f32.mxu0 0.0
    %323 = vmatmul.mubr.f32.gmra.mrb[0].mxu0 %v182
    %v324 = vpop.f32.mrb[0].mxu0
    %v325 = vadd.f32 %v129, %v324
    %v326 = vpop.f32.mrb[0].mxu0
    %327 = vmatprep.mubr.f32.mxu0 0.0
    %328 = vmatmul.mubr.f32.gmra.mrb[0].mxu0 %v185
    %v329 = vpop.f32.mrb[0].mxu0
    %v330 = vadd.f32 %v134, %v329
    %v331 = vpop.f32.mrb[0].mxu0
    %332 = vmatprep.mubr.f32.mxu0 0.0
    %333 = vmatmul.mubr.f32.gmra.mrb[0].mxu0 %v188
    %v334 = vpop.f32.mrb[0].mxu0
    %v335 = vadd.f32 %v139, %v334
    %v336 = vpop.f32.mrb[0].mxu0
    %337 = vdwg.mxu0
    %v338 = vmax.f32 %v260, 0.0
    %v339 = vmax.f32 %v265, 0.0
    %v340 = vmax.f32 %v270, 0.0
    %v341 = vmax.f32 %v275, 0.0
    %v342 = vmax.f32 %v280, 0.0
    %v343 = vmax.f32 %v285, 0.0
    %v344 = vmax.f32 %v290, 0.0
    %v345 = vmax.f32 %v295, 0.0
    %v346 = vmax.f32 %v300, 0.0
    %v347 = vmax.f32 %v305, 0.0
    %v348 = vmax.f32 %v310, 0.0
    %v349 = vmax.f32 %v315, 0.0
    %v350 = vmax.f32 %v320, 0.0
    %v351 = vmax.f32 %v325, 0.0
    %v352 = vmax.f32 %v330, 0.0
    %v353 = vmax.f32 %v335, 0.0
    %v354 = vld [vmem:[%s3] sm:$0xff]
    %v355 = vld [vmem:[%s3 + $0x8] sm:$0xff]
    %v356 = vld [vmem:[%s3 + $0x10] sm:$0xff]
    %v357 = vld [vmem:[%s3 + $0x18] sm:$0xff]
    %v358 = vld [vmem:[%s3 + $0x20] sm:$0xff]
    %v359 = vld [vmem:[%s3 + $0x28] sm:$0xff]
    %v360 = vld [vmem:[%s3 + $0x30] sm:$0xff]
    %v361 = vld [vmem:[%s3 + $0x38] sm:$0xff]
    %v362 = vld [vmem:[%s4] sm:$0xff]
    %v363 = vld [vmem:[%s4 + $0x8] sm:$0xff]
    %v364 = vld [vmem:[%s4 + $0x10] sm:$0xff]
    %v365 = vld [vmem:[%s4 + $0x18] sm:$0xff]
    %v366 = vld [vmem:[%s4 + $0x20] sm:$0xff]
    %v367 = vld [vmem:[%s4 + $0x28] sm:$0xff]
    %v368 = vld [vmem:[%s4 + $0x30] sm:$0xff]
    %v369 = vld [vmem:[%s4 + $0x38] sm:$0xff]
    %371 = vset.pattern.permute.xlu0 0
    %372 = vperm.xlu0 %371, %v362
    %v373 = vpop.permute.xlu0 %372
    %376 = vset.pattern.permute.xlu0 0
    %377 = vperm.xlu0 %376, %v363
    %v378 = vpop.permute.xlu0 %377
    %381 = vset.pattern.permute.xlu0 0
    %382 = vperm.xlu0 %381, %v364
    %v383 = vpop.permute.xlu0 %382
    %386 = vset.pattern.permute.xlu0 0
    %387 = vperm.xlu0 %386, %v365
    %v388 = vpop.permute.xlu0 %387
    %391 = vset.pattern.permute.xlu0 0
    %392 = vperm.xlu0 %391, %v366
    %v393 = vpop.permute.xlu0 %392
    %396 = vset.pattern.permute.xlu0 0
    %397 = vperm.xlu0 %396, %v367
    %v398 = vpop.permute.xlu0 %397
    %401 = vset.pattern.permute.xlu0 0
    %402 = vperm.xlu0 %401, %v368
    %v403 = vpop.permute.xlu0 %402
    %406 = vset.pattern.permute.xlu0 0
    %407 = vperm.xlu0 %406, %v369
    %v408 = vpop.permute.xlu0 %407
    %410 = vmatprep.subr.mxu0 0.0
    %411 = vmatpush1.msra.mxu0 %v338
    %412 = vmatprep.subr.mxu0 0.0
    %413 = vmatpush1.msra.mxu0 %v339
    %414 = vmatprep.subr.mxu0 0.0
    %415 = vmatpush1.msra.mxu0 %v340
    %416 = vmatprep.subr.mxu0 0.0
    %417 = vmatpush1.msra.mxu0 %v341
    %418 = vmatprep.subr.mxu0 0.0
    %419 = vmatpush1.msra.mxu0 %v342
    %420 = vmatprep.subr.mxu0 0.0
    %421 = vmatpush1.msra.mxu0 %v343
    %422 = vmatprep.subr.mxu0 0.0
    %423 = vmatpush1.msra.mxu0 %v344
    %424 = vmatprep.subr.mxu0 0.0
    %425 = vmatpush1.msra.mxu0 %v345
    %426 = vmatprep.subr.mxu0 0.0
    %427 = vmatpush1.msra.mxu0 %v346
    %428 = vmatprep.subr.mxu0 0.0
    %429 = vmatpush1.msra.mxu0 %v347
    %430 = vmatprep.subr.mxu0 0.0
    %431 = vmatpush1.msra.mxu0 %v348
    %432 = vmatprep.subr.mxu0 0.0
    %433 = vmatpush1.msra.mxu0 %v349
    %434 = vmatprep.subr.mxu0 0.0
    %435 = vmatpush1.msra.mxu0 %v350
    %436 = vmatprep.subr.mxu0 0.0
    %437 = vmatpush1.msra.mxu0 %v351
    %438 = vmatprep.subr.mxu0 0.0
    %439 = vmatpush1.msra.mxu0 %v352
    %440 = vmatprep.subr.mxu0 0.0
    %441 = vmatpush1.msra.mxu0 %v353
    %442 = vmatprep.subr.mxu0 0.0
    %443 = vmatpush1.msra.mxu0 0.0
    %444 = vmatprep.subr.mxu0 0.0
    %445 = vmatpush1.msra.mxu0 0.0
    %446 = vmatprep.subr.mxu0 0.0
    %447 = vmatpush1.msra.mxu0 0.0
    %448 = vmatprep.subr.mxu0 0.0
    %449 = vmatpush1.msra.mxu0 0.0
    %450 = vmatprep.subr.mxu0 0.0
    %451 = vmatpush1.msra.mxu0 0.0
    %452 = vmatprep.subr.mxu0 0.0
    %453 = vmatpush1.msra.mxu0 0.0
    %454 = vmatprep.subr.mxu0 0.0
    %455 = vmatpush1.msra.mxu0 0.0
    %456 = vmatprep.subr.mxu0 0.0
    %457 = vmatpush1.msra.mxu0 0.0
    %458 = vmatprep.subr.mxu0 0.0
    %459 = vmatpush1.msra.mxu0 0.0
    %460 = vmatprep.subr.mxu0 0.0
    %461 = vmatpush1.msra.mxu0 0.0
    %462 = vmatprep.subr.mxu0 0.0
    %463 = vmatpush1.msra.mxu0 0.0
    %464 = vmatprep.subr.mxu0 0.0
    %465 = vmatpush1.msra.mxu0 0.0
    %466 = vmatprep.subr.mxu0 0.0
    %467 = vmatpush1.msra.mxu0 0.0
    %468 = vmatprep.subr.mxu0 0.0
    %469 = vmatpush1.msra.mxu0 0.0
    %470 = vmatprep.subr.mxu0 0.0
    %471 = vmatpush1.msra.mxu0 0.0
    %472 = vmatprep.subr.mxu0 0.0
    %473 = vmatpush1.msra.mxu0 0.0
    %474 = vmatprep.mubr.f32.mxu0 0.0
    %475 = vmatmul.mubr.f32.gmra.mrb[0].mxu0 %v354
    %v476 = vpop.f32.mrb[0].mxu0
    %v477 = vadd.f32 %v373, %v476
    %v478 = vpop.f32.mrb[0].mxu0
    %479 = vmatprep.mubr.f32.mxu0 0.0
    %480 = vmatmul.mubr.f32.gmra.mrb[0].mxu0 %v355
    %v481 = vpop.f32.mrb[0].mxu0
    %v482 = vadd.f32 %v378, %v481
    %v483 = vpop.f32.mrb[0].mxu0
    %484 = vmatprep.mubr.f32.mxu0 0.0
    %485 = vmatmul.mubr.f32.gmra.mrb[0].mxu0 %v356
    %v486 = vpop.f32.mrb[0].mxu0
    %v487 = vadd.f32 %v383, %v486
    %v488 = vpop.f32.mrb[0].mxu0
    %489 = vmatprep.mubr.f32.mxu0 0.0
    %490 = vmatmul.mubr.f32.gmra.mrb[0].mxu0 %v357
    %v491 = vpop.f32.mrb[0].mxu0
    %v492 = vadd.f32 %v388, %v491
    %v493 = vpop.f32.mrb[0].mxu0
    %494 = vmatprep.mubr.f32.mxu0 0.0
    %495 = vmatmul.mubr.f32.gmra.mrb[0].mxu0 %v358
    %v496 = vpop.f32.mrb[0].mxu0
    %v497 = vadd.f32 %v393, %v496
    %v498 = vpop.f32.mrb[0].mxu0
    %499 = vmatprep.mubr.f32.mxu0 0.0
    %500 = vmatmul.mubr.f32.gmra.mrb[0].mxu0 %v359
    %v501 = vpop.f32.mrb[0].mxu0
    %v502 = vadd.f32 %v398, %v501
    %v503 = vpop.f32.mrb[0].mxu0
    %504 = vmatprep.mubr.f32.mxu0 0.0
    %505 = vmatmul.mubr.f32.gmra.mrb[0].mxu0 %v360
    %v506 = vpop.f32.mrb[0].mxu0
    %v507 = vadd.f32 %v403, %v506
    %v508 = vpop.f32.mrb[0].mxu0
    %509 = vmatprep.mubr.f32.mxu0 0.0
    %510 = vmatmul.mubr.f32.gmra.mrb[0].mxu0 %v361
    %v511 = vpop.f32.mrb[0].mxu0
    %v512 = vadd.f32 %v408, %v511
    %v513 = vpop.f32.mrb[0].mxu0
    %514 = vdwg.mxu0
    %v515 = vmax.f32 %v477, 0.0
    %v516 = vmax.f32 %v482, 0.0
    %v517 = vmax.f32 %v487, 0.0
    %v518 = vmax.f32 %v492, 0.0
    %v519 = vmax.f32 %v497, 0.0
    %v520 = vmax.f32 %v502, 0.0
    %v521 = vmax.f32 %v507, 0.0
    %v522 = vmax.f32 %v512, 0.0
    %v523 = vld [vmem:[%s5] sm:$0x1]
    %s524 = sld [smem:[#allocation2]]
    %v525 = vstv %s524
    %vm526 = vcmask 523264
    %v528 = vsel %vm526, %v523, 0
    %530 = vmatprep.subr.mxu0 0.0
    %531 = vmatpush1.msra.mxu0 %v515
    %532 = vmatprep.subr.mxu0 0.0
    %533 = vmatpush1.msra.mxu0 %v516
    %534 = vmatprep.subr.mxu0 0.0
    %535 = vmatpush1.msra.mxu0 %v517
    %536 = vmatprep.subr.mxu0 0.0
    %537 = vmatpush1.msra.mxu0 %v518
    %538 = vmatprep.subr.mxu0 0.0
    %539 = vmatpush1.msra.mxu0 %v519
    %540 = vmatprep.subr.mxu0 0.0
    %541 = vmatpush1.msra.mxu0 %v520
    %542 = vmatprep.subr.mxu0 0.0
    %543 = vmatpush1.msra.mxu0 %v521
    %544 = vmatprep.subr.mxu0 0.0
    %545 = vmatpush1.msra.mxu0 %v522
    %546 = vmatprep.subr.mxu0 0.0
    %547 = vmatpush1.msra.mxu0 0.0
    %548 = vmatprep.subr.mxu0 0.0
    %549 = vmatpush1.msra.mxu0 0.0
    %550 = vmatprep.subr.mxu0 0.0
    %551 = vmatpush1.msra.mxu0 0.0
    %552 = vmatprep.subr.mxu0 0.0
    %553 = vmatpush1.msra.mxu0 0.0
    %554 = vmatprep.subr.mxu0 0.0
    %555 = vmatpush1.msra.mxu0 0.0
    %556 = vmatprep.subr.mxu0 0.0
    %557 = vmatpush1.msra.mxu0 0.0
    %558 = vmatprep.subr.mxu0 0.0
    %559 = vmatpush1.msra.mxu0 0.0
    %560 = vmatprep.subr.mxu0 0.0
    %561 = vmatpush1.msra.mxu0 0.0
    %562 = vmatprep.subr.mxu0 0.0
    %563 = vmatpush1.msra.mxu0 0.0
    %564 = vmatprep.subr.mxu0 0.0
    %565 = vmatpush1.msra.mxu0 0.0
    %566 = vmatprep.subr.mxu0 0.0
    %567 = vmatpush1.msra.mxu0 0.0
    %568 = vmatprep.subr.mxu0 0.0
    %569 = vmatpush1.msra.mxu0 0.0
    %570 = vmatprep.subr.mxu0 0.0
    %571 = vmatpush1.msra.mxu0 0.0
    %572 = vmatprep.subr.mxu0 0.0
    %573 = vmatpush1.msra.mxu0 0.0
    %574 = vmatprep.subr.mxu0 0.0
    %575 = vmatpush1.msra.mxu0 0.0
    %576 = vmatprep.subr.mxu0 0.0
    %577 = vmatpush1.msra.mxu0 0.0
    %578 = vmatprep.subr.mxu0 0.0
    %579 = vmatpush1.msra.mxu0 0.0
    %580 = vmatprep.subr.mxu0 0.0
    %581 = vmatpush1.msra.mxu0 0.0
    %582 = vmatprep.subr.mxu0 0.0
    %583 = vmatpush1.msra.mxu0 0.0
    %584 = vmatprep.subr.mxu0 0.0
    %585 = vmatpush1.msra.mxu0 0.0
    %586 = vmatprep.subr.mxu0 0.0
    %587 = vmatpush1.msra.mxu0 0.0
    %588 = vmatprep.subr.mxu0 0.0
    %589 = vmatpush1.msra.mxu0 0.0
    %590 = vmatprep.subr.mxu0 0.0
    %591 = vmatpush1.msra.mxu0 0.0
    %592 = vmatprep.subr.mxu0 0.0
    %593 = vmatpush1.msra.mxu0 0.0
    %594 = vmatprep.mubr.f32.mxu0 0.0
    %595 = vmatmul.mubr.f32.gmra.mrb[0].mxu0 %v528
    %v596 = vpop.f32.mrb[0].mxu0
    %v597 = vadd.f32 %v525, %v596
    %v598 = vpop.f32.mrb[0].mxu0
    %599 = vdwg.mxu0
    %vm600 = vcmask 57344
    %601 = vst.msk [vmem:[#allocation3] sm:$0x1] %vm600, %v597
    // Predicated region
    $region30: #{tpu_custom_call.1} parent=1 // pred_check
      _
    $region31: #{tpu_custom_call.1} parent=1 // pred_check_branch
      %603 = sbr.rel (0) target = $region33
    $region32: #{tpu_custom_call.1} parent=1 // pred_region
      %s605 = ssub.s32 16, 16
      %606 = vsyncadd [#allocation4], %s605
      %s608 = sshll.u32 [#allocation3], 4
      %s609 = int_to_ptr.vmem [resolvable:$true] %s608
      %611 = dma.vmem_to_hbm [thread:$0]  %s609, 16, %s7, [#allocation4]
    $region33: #{tpu_custom_call.1} parent=1 // pred_fallthru
      _
    // Predicated region
    $region34: #{tpu_custom_call.1} parent=1 // pred_check
      _
    $region35: #{tpu_custom_call.1} parent=1 // pred_check_branch
      %613 = sbr.rel (0) target = $region37
    $region36: #{tpu_custom_call.1} parent=1 // pred_region
      %614 = dma.done [#allocation4], 16
    $region37: #{tpu_custom_call.1} parent=1 // pred_fallthru
      _
    %615 = vsyncpa [#allocation4], 1

</llo_original>
